<compile_context>
chip_gen: v7x
topology: tpu7x:2x2x1
jax: 0.10.0
libtpu: 0.0.40
codegen_flags: <defaults>
</compile_context>

<pallas_src>
import functools

import jax
import jax.numpy as jnp
from jax.experimental import pallas as pl
from jax.experimental.pallas import tpu as pltpu


def _make_critic_kernel(num_hidden_layers: int):
    """Builds a Pallas kernel computing the Critic forward for `layer` hidden layers."""

    def kernel(*refs):
        # refs = (state, action, w1s, w1a, b1, [w2, b2, [w3, b3]], wf, bf, out)
        state_ref, action_ref = refs[0], refs[1]
        out_ref = refs[-1]
        p = refs[2:-1]

        w1s = p[0][...]          # [state_size, units]
        w1a = p[1][...]          # [action_size, units]
        b1 = p[2][...]           # [1, units]

        # Split first matmul -> avoids a non-lane-aligned concat; two MXU
        # pushes accumulate into the same f32 accumulator.
        h = jnp.dot(state_ref[...], w1s, preferred_element_type=jnp.float32)
        h = h + jnp.dot(action_ref[...], w1a, preferred_element_type=jnp.float32)
        h = jnp.maximum(h + b1, 0.0)

        idx = 3
        for _ in range(num_hidden_layers - 1):
            w = p[idx][...]       # [units, units]
            b = p[idx + 1][...]   # [1, units]
            idx += 2
            h = jnp.maximum(
                jnp.dot(h, w, preferred_element_type=jnp.float32) + b, 0.0
            )

        wf = p[idx][...]          # [1, units] (row form of the [units, 1] weight)
        bf = p[idx + 1][...]      # [1, 1]
        # N=1 output: VPU multiply + lane reduce instead of a 1-wide MXU matmul.
        out_ref[...] = jnp.sum(h * wf, axis=-1, keepdims=True) + bf

    return kernel


def _batch_map(i):
    return (i, 0)


def _const_map(i, nd):
    return (0,) * nd


def critic_forward(state, action, params, *, layer=1, batch_tile=None):
    """params: list [(W1, b1), (W2, b2)?, (W3, b3)?, (Wf, bf)] with W as [in, out]."""
    B, state_size = state.shape
    _, action_size = action.shape
    units = params[0][0].shape[1]

    # Batch tile: keep per-step VMEM bounded and allow megacore sharding on v7x.
    if batch_tile is None:
        batch_tile = B if B <= 512 else 512
    TB = batch_tile
    grid = (pl.cdiv(B, TB),)

    # Split W1 so the kernel never concatenates along the lane axis.
    (w1, b1) = params[0]
    w1s = w1[:state_size, :]
    w1a = w1[state_size:, :]

    flat_inputs = [state, action, w1s, w1a, b1.reshape(1, -1)]
    for (w, b) in params[1:layer]:
        flat_inputs.append(w)
        flat_inputs.append(b.reshape(1, -1))
    wf, bf = params[-1]
    flat_inputs.append(wf.reshape(1, -1))   # [1, units], broadcasts over batch
    flat_inputs.append(bf.reshape(1, 1))    # [1, 1]

    in_specs = [
        pl.BlockSpec((TB, state_size), _batch_map),
        pl.BlockSpec((TB, action_size), _batch_map),
    ]
    # Weights / biases: full-array blocks, constant index_map (resident each step).
    for x in flat_inputs[2:]:
        in_specs.append(
            pl.BlockSpec(x.shape, functools.partial(_const_map, nd=x.ndim))
        )
    out_spec = pl.BlockSpec((TB, 1), _batch_map)

    # Advisory cost estimate so XLA schedules the surrounding graph sensibly.
    dims = [(state_size + action_size, units)]
    for _ in range(1, layer):
        dims.append((units, units))
    dims.append((units, 1))
    flops = sum(2 * B * k * n for (k, n) in dims)
    bytes_accessed = sum(int(x.size) * x.dtype.itemsize for x in flat_inputs) + B * 4
    cost = pl.CostEstimate(
        flops=int(flops), transcendentals=0, bytes_accessed=int(bytes_accessed)
    )

    kernel = _make_critic_kernel(num_hidden_layers=layer)

    return pl.pallas_call(
        kernel,
        out_shape=jax.ShapeDtypeStruct((B, 1), jnp.float32),
        grid=grid,
        in_specs=in_specs,
        out_specs=out_spec,
        cost_estimate=cost,
        compiler_params=pltpu.CompilerParams(
            dimension_semantics=("parallel",)
        ),
    )(*flat_inputs)


def init_critic_params(key, state_size, action_size, units, layer=1):
    """Deterministic init mimicking nn.Linear default (uniform +/- 1/sqrt(fan_in)).

    Returns weights already transposed to [in_features, out_features].
    """
    params = []
    dims = [(state_size + action_size, units)]
    if layer > 1:
        dims.append((units, units))
    if layer > 2:
        dims.append((units, units))
    dims.append((units, 1))

    for (fan_in, fan_out) in dims:
        key, kw, kb = jax.random.split(key, 3)
        bound = 1.0 / (fan_in ** 0.5)
        w = jax.random.uniform(
            kw, (fan_in, fan_out), jnp.float32, minval=-bound, maxval=bound
        )
        b = jax.random.uniform(
            kb, (fan_out,), jnp.float32, minval=-bound, maxval=bound
        )
        params.append((w, b))
    return params


def critic_reference(state, action, params, *, layer=1):
    """Plain-JAX reference for correctness check."""
    xs = jnp.concatenate([state, action], axis=1)
    h = xs
    for i in range(layer):
        w, b = params[i]
        h = jnp.maximum(h @ w + b, 0.0)
    wf, bf = params[-1]
    return h @ wf + bf


if __name__ == "__main__":
    # Small shapes consistent with the module's forward.
    batch = 8
    state_size = 16
    action_size = 8
    units = 32

    key = jax.random.PRNGKey(0)
    k_state, k_action, k_params = jax.random.split(key, 3)

    state = jax.random.normal(k_state, (batch, state_size), jnp.float32)
    action = jax.random.normal(k_action, (batch, action_size), jnp.float32)

    # Exercise all three branch configurations (fcs1 only / +fcs2 / +fcs3).
    for layer in (1, 2, 3):
        params = init_critic_params(
            k_params, state_size, action_size, units, layer=layer
        )
        q = critic_forward(state, action, params, layer=layer)
        q = jax.block_until_ready(q)

        q_ref = critic_reference(state, action, params, layer=layer)
        assert q.shape == (batch, 1), q.shape
        assert jnp.allclose(q, q_ref, atol=1e-5, rtol=1e-5), (layer, q, q_ref)

    print("KERNEL_OK")
</pallas_src>

<mosaic_0001>
module attributes {stable_mosaic.version = 11 : i64} {
  func.func @kernel(%arg0: i32, %arg1: memref<8x16xf32, #tpu.memory_space<vmem>>, %arg2: memref<8x8xf32, #tpu.memory_space<vmem>>, %arg3: memref<16x32xf32, #tpu.memory_space<vmem>>, %arg4: memref<8x32xf32, #tpu.memory_space<vmem>>, %arg5: memref<1x32xf32, #tpu.memory_space<vmem>>, %arg6: memref<1x32xf32, #tpu.memory_space<vmem>>, %arg7: memref<1x1xf32, #tpu.memory_space<vmem>>, %arg8: memref<8x1xf32, #tpu.memory_space<vmem>>) attributes {dimension_semantics = [#tpu.dimension_semantics<parallel>], iteration_bounds = array<i64: 1>, scalar_prefetch = 0 : i64, scratch_operands = 0 : i64, tpu.core_type = #tpu.core_type<tc>, window_params = [{transform_indices = @transform_0, window_bounds = array<i64: 8, 16>}, {transform_indices = @transform_1, window_bounds = array<i64: 8, 8>}, {pipeline_mode = #tpu.pipeline_mode<synchronous>, transform_indices = @transform_2, window_bounds = array<i64: 16, 32>}, {pipeline_mode = #tpu.pipeline_mode<synchronous>, transform_indices = @transform_3, window_bounds = array<i64: 8, 32>}, {pipeline_mode = #tpu.pipeline_mode<synchronous>, transform_indices = @transform_4, window_bounds = array<i64: 1, 32>}, {pipeline_mode = #tpu.pipeline_mode<synchronous>, transform_indices = @transform_5, window_bounds = array<i64: 1, 32>}, {pipeline_mode = #tpu.pipeline_mode<synchronous>, transform_indices = @transform_6, window_bounds = array<i64: 1, 1>}, {transform_indices = @transform_7, window_bounds = array<i64: 8, 1>}]} {
    %c0 = arith.constant 0 : index
    %c0_0 = arith.constant 0 : index
    %0 = vector.load %arg3[%c0, %c0_0] : memref<16x32xf32, #tpu.memory_space<vmem>>, vector<16x32xf32>
    %c0_1 = arith.constant 0 : index
    %c0_2 = arith.constant 0 : index
    %1 = vector.load %arg4[%c0_1, %c0_2] : memref<8x32xf32, #tpu.memory_space<vmem>>, vector<8x32xf32>
    %c0_3 = arith.constant 0 : index
    %c0_4 = arith.constant 0 : index
    %2 = vector.load %arg5[%c0_3, %c0_4] : memref<1x32xf32, #tpu.memory_space<vmem>>, vector<1x32xf32>
    %c0_5 = arith.constant 0 : index
    %c0_6 = arith.constant 0 : index
    %3 = vector.load %arg1[%c0_5, %c0_6] : memref<8x16xf32, #tpu.memory_space<vmem>>, vector<8x16xf32>
    %cst = arith.constant dense<0.000000e+00> : vector<8x32xf32>
    %4 = tpu.matmul %3, %0, %cst {dimension_numbers = #tpu.dot_dimension_numbers<[1], [0], [0], [1], [0, 0, 1, 1], [], []>} : vector<8x16xf32>, vector<16x32xf32>, vector<8x32xf32> -> vector<8x32xf32>
    %c0_7 = arith.constant 0 : index
    %c0_8 = arith.constant 0 : index
    %5 = vector.load %arg2[%c0_7, %c0_8] : memref<8x8xf32, #tpu.memory_space<vmem>>, vector<8x8xf32>
    %cst_9 = arith.constant dense<0.000000e+00> : vector<8x32xf32>
    %6 = tpu.matmul %5, %1, %cst_9 {dimension_numbers = #tpu.dot_dimension_numbers<[1], [0], [0], [1], [0, 0, 1, 1], [], []>} : vector<8x8xf32>, vector<8x32xf32>, vector<8x32xf32> -> vector<8x32xf32>
    %7 = arith.addf %4, %6 : vector<8x32xf32>
    %8 = vector.broadcast %2 : vector<1x32xf32> to vector<8x32xf32>
    %9 = arith.addf %7, %8 : vector<8x32xf32>
    %cst_10 = arith.constant 0.000000e+00 : f32
    %10 = vector.broadcast %cst_10 : f32 to vector<8x32xf32>
    %11 = arith.maximumf %9, %10 : vector<8x32xf32>
    %c0_11 = arith.constant 0 : index
    %c0_12 = arith.constant 0 : index
    %12 = vector.load %arg6[%c0_11, %c0_12] : memref<1x32xf32, #tpu.memory_space<vmem>>, vector<1x32xf32>
    %c0_13 = arith.constant 0 : index
    %c0_14 = arith.constant 0 : index
    %13 = vector.load %arg7[%c0_13, %c0_14] : memref<1x1xf32, #tpu.memory_space<vmem>>, vector<1x1xf32>
    %14 = vector.broadcast %12 : vector<1x32xf32> to vector<8x32xf32>
    %15 = arith.mulf %11, %14 : vector<8x32xf32>
    %cst_15 = arith.constant dense<0.000000e+00> : vector<8xf32>
    %16 = vector.multi_reduction <add>, %15, %cst_15 [1] : vector<8x32xf32> to vector<8xf32>
    %17 = vector.shape_cast %16 : vector<8xf32> to vector<8x1xf32>
    %18 = vector.broadcast %13 : vector<1x1xf32> to vector<8x1xf32>
    %19 = arith.addf %17, %18 : vector<8x1xf32>
    %c0_16 = arith.constant 0 : index
    %c0_17 = arith.constant 0 : index
    %20 = vector.load %arg8[%c0_16, %c0_17] : memref<8x1xf32, #tpu.memory_space<vmem>>, vector<8x1xf32>
    tpu.vector_store %arg8[%c0_16, %c0_17], %19 {strides = array<i32>} : memref<8x1xf32, #tpu.memory_space<vmem>>, vector<8x1xf32>,
    return
  }
  func.func @transform_0(%arg0: i32) -> (i32, i32) {
    %c0_i32 = arith.constant 0 : i32
    %c0_i32_0 = arith.constant 0 : i32
    return %arg0, %c0_i32 : i32, i32
  }
  func.func @transform_1(%arg0: i32) -> (i32, i32) {
    %c0_i32 = arith.constant 0 : i32
    %c0_i32_0 = arith.constant 0 : i32
    return %arg0, %c0_i32 : i32, i32
  }
  func.func @transform_2(%arg0: i32) -> (i32, i32) {
    %c0_i32 = arith.constant 0 : i32
    %c0_i32_0 = arith.constant 0 : i32
    %c0_i32_1 = arith.constant 0 : i32
    return %c0_i32, %c0_i32_0 : i32, i32
  }
  func.func @transform_3(%arg0: i32) -> (i32, i32) {
    %c0_i32 = arith.constant 0 : i32
    %c0_i32_0 = arith.constant 0 : i32
    %c0_i32_1 = arith.constant 0 : i32
    return %c0_i32, %c0_i32_0 : i32, i32
  }
  func.func @transform_4(%arg0: i32) -> (i32, i32) {
    %c0_i32 = arith.constant 0 : i32
    %c0_i32_0 = arith.constant 0 : i32
    %c0_i32_1 = arith.constant 0 : i32
    return %c0_i32, %c0_i32_0 : i32, i32
  }
  func.func @transform_5(%arg0: i32) -> (i32, i32) {
    %c0_i32 = arith.constant 0 : i32
    %c0_i32_0 = arith.constant 0 : i32
    %c0_i32_1 = arith.constant 0 : i32
    return %c0_i32, %c0_i32_0 : i32, i32
  }
  func.func @transform_6(%arg0: i32) -> (i32, i32) {
    %c0_i32 = arith.constant 0 : i32
    %c0_i32_0 = arith.constant 0 : i32
    %c0_i32_1 = arith.constant 0 : i32
    return %c0_i32, %c0_i32_0 : i32, i32
  }
  func.func @transform_7(%arg0: i32) -> (i32, i32) {
    %c0_i32 = arith.constant 0 : i32
    %c0_i32_0 = arith.constant 0 : i32
    return %arg0, %c0_i32 : i32, i32
  }
}

</mosaic_0001>

<llo_original>
// kernel: tpu_custom_call.1
$region0: #{tpu_custom_call.1}
  #allocation0 [shape = 'u32[]', space=smem, size = 0x4, offset = 0x4, fixed_abs, tag = 'smem constant byte address 0x4 - core index']
  #allocation1 [shape = 'u32[144,128]{1,0:T(1,128)}', space=vmem, size = 0x12000, scoped, tag = 'internal scratch']
  #allocation2 [shape = 'f32[1,1]{1,0:T(1,128)S(1)}', space=vmem, size = 0x200, scoped, tag = 'scoped memory for tpu_custom_call.1']
  %s0 = inlined_call_operand.hbm [shape: f32[8,16], index: 0, kind: input, shape index: {}]
  %s1 = inlined_call_operand.hbm [shape: f32[8,8], index: 1, kind: input, shape index: {}]
  %s2 = inlined_call_operand.hbm [shape: f32[16,32], index: 2, kind: input, shape index: {}]
  %s3 = inlined_call_operand.vmem [shape: f32[8,32], index: 3, kind: input, shape index: {}]
  %s4 = inlined_call_operand.vmem [shape: f32[1,32], index: 4, kind: input, shape index: {}]
  %s5 = inlined_call_operand.vmem [shape: f32[1,32], index: 5, kind: input, shape index: {}]
  %s6 = inlined_call_operand.<no memory space> [shape: f32[1,1], index: 6, kind: input, shape index: {}]
  %s7 = inlined_call_operand.vmem [shape: f32[8,1], index: 7, kind: output, shape index: {}]
  %s8 = sld [smem:[#allocation0]]
  $region50: #{tpu_custom_call.1} parent=0
    _
  %s10 = ssub.s32 1, %s8
  %s11 = scalar_select 0, %s10, %s8
  %v12 = vstv %s6
  %13 = vst [vmem:[#allocation2] sm:$0x1] %v12
  $region1: #{tpu_custom_call.1} parent=0
    #allocation3 [shape = 'u8[4096]{0}', space=vmem, size = 0x1000, scoped, tag = 'input window, operand 0, single buffered']
    #allocation4 [shape = 's32[1]{0}', space=sflag, size = 0x4, scoped, tag = 'scoped memory for tpu_custom_call.1']
    #allocation5 [shape = 'u8[4096]{0}', space=vmem, size = 0x1000, scoped, tag = 'input window, operand 1, single buffered']
    #allocation6 [shape = 's32[1]{0}', space=sflag, size = 0x4, scoped, tag = 'scoped memory for tpu_custom_call.1']
    #allocation7 [shape = 'u8[8192]{0}', space=vmem, size = 0x2000, scoped, tag = 'input window, operand 2, single buffered']
    %14 = vsyncpa [#allocation4], 0
    %15 = vsyncpa [#allocation6], 0
    // Predicated region
    $region2: #{tpu_custom_call.1} parent=1 // pred_check
      _
    $region3: #{tpu_custom_call.1} parent=1 // pred_check_branch
      %17 = sbr.rel (0) target = $region5
    $region4: #{tpu_custom_call.1} parent=1 // pred_region
      %s19 = ssub.s32 128, 128
      %20 = vsyncadd [#allocation4], %s19
      %s22 = sshll.u32 [#allocation3], 4
      %s23 = int_to_ptr.vmem [resolvable:$true] %s22
      %25 = dma.hbm_to_vmem [thread:$0]  %s0, 128, %s23, [#allocation4]
    $region5: #{tpu_custom_call.1} parent=1 // pred_fallthru
      _
    // Predicated region
    $region6: #{tpu_custom_call.1} parent=1 // pred_check
      _
    $region7: #{tpu_custom_call.1} parent=1 // pred_check_branch
      %27 = sbr.rel (0) target = $region9
    $region8: #{tpu_custom_call.1} parent=1 // pred_region
      %s29 = ssub.s32 128, 128
      %30 = vsyncadd [#allocation6], %s29
      %s32 = sshll.u32 [#allocation5], 4
      %s33 = int_to_ptr.vmem [resolvable:$true] %s32
      %35 = dma.hbm_to_vmem [thread:$0]  %s1, 128, %s33, [#allocation6]
    $region9: #{tpu_custom_call.1} parent=1 // pred_fallthru
      _
    // Predicated region
    $region10: #{tpu_custom_call.1} parent=1 // pred_check
      _
    $region11: #{tpu_custom_call.1} parent=1 // pred_check_branch
      %37 = sbr.rel (0) target = $region13
    $region12: #{tpu_custom_call.1} parent=1 // pred_region
      %s39 = ssub.s32 256, 256
      %40 = vsyncadd [#allocation6], %s39
      %s41 = sshll.u32 [#allocation7], 4
      %s42 = int_to_ptr.vmem [resolvable:$true] %s41
      %47 = dma.hbm_to_vmem [thread:$0]  %s2, 256, %s42, [#allocation6], 128, 128, 8
    $region13: #{tpu_custom_call.1} parent=1 // pred_fallthru
      _
    // Predicated region
    $region14: #{tpu_custom_call.1} parent=1 // pred_check
      _
    $region15: #{tpu_custom_call.1} parent=1 // pred_check_branch
      %49 = sbr.rel (0) target = $region17
    $region16: #{tpu_custom_call.1} parent=1 // pred_region
      _
    $region17: #{tpu_custom_call.1} parent=1 // pred_fallthru
      _
    // Predicated region
    $region18: #{tpu_custom_call.1} parent=1 // pred_check
      _
    $region19: #{tpu_custom_call.1} parent=1 // pred_check_branch
      %51 = sbr.rel (0) target = $region21
    $region20: #{tpu_custom_call.1} parent=1 // pred_region
      _
    $region21: #{tpu_custom_call.1} parent=1 // pred_fallthru
      _
    // Predicated region
    $region22: #{tpu_custom_call.1} parent=1 // pred_check
      _
    $region23: #{tpu_custom_call.1} parent=1 // pred_check_branch
      %53 = sbr.rel (0) target = $region25
    $region24: #{tpu_custom_call.1} parent=1 // pred_region
      _
    $region25: #{tpu_custom_call.1} parent=1 // pred_fallthru
      _
    // Predicated region
    $region26: #{tpu_custom_call.1} parent=1 // pred_check
      _
    $region27: #{tpu_custom_call.1} parent=1 // pred_check_branch
      %55 = sbr.rel (0) target = $region29
    $region28: #{tpu_custom_call.1} parent=1 // pred_region
      _
    $region29: #{tpu_custom_call.1} parent=1 // pred_fallthru
      _
    // Predicated region
    $region30: #{tpu_custom_call.1} parent=1 // pred_check
      _
    $region31: #{tpu_custom_call.1} parent=1 // pred_check_branch
      %57 = sbr.rel (0) target = $region33
    $region32: #{tpu_custom_call.1} parent=1 // pred_region
      %58 = dma.done [#allocation4], 128
    $region33: #{tpu_custom_call.1} parent=1 // pred_fallthru
      _
    // Predicated region
    $region34: #{tpu_custom_call.1} parent=1 // pred_check
      _
    $region35: #{tpu_custom_call.1} parent=1 // pred_check_branch
      %60 = sbr.rel (0) target = $region37
    $region36: #{tpu_custom_call.1} parent=1 // pred_region
      %61 = dma.done [#allocation6], 128
    $region37: #{tpu_custom_call.1} parent=1 // pred_fallthru
      _
    // Predicated region
    $region38: #{tpu_custom_call.1} parent=1 // pred_check
      _
    $region39: #{tpu_custom_call.1} parent=1 // pred_check_branch
      %63 = sbr.rel (0) target = $region41
    $region40: #{tpu_custom_call.1} parent=1 // pred_region
      %64 = dma.done [#allocation6], 256
    $region41: #{tpu_custom_call.1} parent=1 // pred_fallthru
      _
    %v65 = vld [vmem:[#allocation7] sm:$0xff]
    %v66 = vld [vmem:[#allocation7 + $0x8] sm:$0xff]
    %v67 = vld [vmem:[%s3] sm:$0xff]
    %v68 = vld [vmem:[%s4] sm:$0x1]
    %v69 = vld [vmem:[#allocation3] sm:$0xff]
    %v70 = vld [vmem:[#allocation5] sm:$0xff]
    %vm71 = vcmask 64512
    %v73 = vsel %vm71, %v70, 0
    %75 = vmatprep.subr.mxu0 0.0
    %76 = vmatpush1.msra.mxu0 %v67
    %77 = vmatprep.subr.mxu0 0.0
    %78 = vmatpush1.msra.mxu0 0.0
    %79 = vmatprep.subr.mxu0 0.0
    %80 = vmatpush1.msra.mxu0 0.0
    %81 = vmatprep.subr.mxu0 0.0
    %82 = vmatpush1.msra.mxu0 0.0
    %83 = vmatprep.subr.mxu0 0.0
    %84 = vmatpush1.msra.mxu0 0.0
    %85 = vmatprep.subr.mxu0 0.0
    %86 = vmatpush1.msra.mxu0 0.0
    %87 = vmatprep.subr.mxu0 0.0
    %88 = vmatpush1.msra.mxu0 0.0
    %89 = vmatprep.subr.mxu0 0.0
    %90 = vmatpush1.msra.mxu0 0.0
    %91 = vmatprep.subr.mxu0 0.0
    %92 = vmatpush1.msra.mxu0 0.0
    %93 = vmatprep.subr.mxu0 0.0
    %94 = vmatpush1.msra.mxu0 0.0
    %95 = vmatprep.subr.mxu0 0.0
    %96 = vmatpush1.msra.mxu0 0.0
    %97 = vmatprep.subr.mxu0 0.0
    %98 = vmatpush1.msra.mxu0 0.0
    %99 = vmatprep.subr.mxu0 0.0
    %100 = vmatpush1.msra.mxu0 0.0
    %101 = vmatprep.subr.mxu0 0.0
    %102 = vmatpush1.msra.mxu0 0.0
    %103 = vmatprep.subr.mxu0 0.0
    %104 = vmatpush1.msra.mxu0 0.0
    %105 = vmatprep.subr.mxu0 0.0
    %106 = vmatpush1.msra.mxu0 0.0
    %107 = vmatprep.subr.mxu0 0.0
    %108 = vmatpush1.msra.mxu0 0.0
    %109 = vmatprep.subr.mxu0 0.0
    %110 = vmatpush1.msra.mxu0 0.0
    %111 = vmatprep.subr.mxu0 0.0
    %112 = vmatpush1.msra.mxu0 0.0
    %113 = vmatprep.subr.mxu0 0.0
    %114 = vmatpush1.msra.mxu0 0.0
    %115 = vmatprep.subr.mxu0 0.0
    %116 = vmatpush1.msra.mxu0 0.0
    %117 = vmatprep.subr.mxu0 0.0
    %118 = vmatpush1.msra.mxu0 0.0
    %119 = vmatprep.subr.mxu0 0.0
    %120 = vmatpush1.msra.mxu0 0.0
    %121 = vmatprep.subr.mxu0 0.0
    %122 = vmatpush1.msra.mxu0 0.0
    %123 = vmatprep.subr.mxu0 0.0
    %124 = vmatpush1.msra.mxu0 0.0
    %125 = vmatprep.subr.mxu0 0.0
    %126 = vmatpush1.msra.mxu0 0.0
    %127 = vmatprep.subr.mxu0 0.0
    %128 = vmatpush1.msra.mxu0 0.0
    %129 = vmatprep.subr.mxu0 0.0
    %130 = vmatpush1.msra.mxu0 0.0
    %131 = vmatprep.subr.mxu0 0.0
    %132 = vmatpush1.msra.mxu0 0.0
    %133 = vmatprep.subr.mxu0 0.0
    %134 = vmatpush1.msra.mxu0 0.0
    %135 = vmatprep.subr.mxu0 0.0
    %136 = vmatpush1.msra.mxu0 0.0
    %137 = vmatprep.subr.mxu0 0.0
    %138 = vmatpush1.msra.mxu0 0.0
    %139 = vmatprep.mubr.f32.mxu0 0.0
    %140 = vmatmul.mubr.f32.gmra.mrb[0].mxu0 %v73
    %v141 = vpop.f32.mrb[0].mxu0
    %v142 = vadd.f32 0.0, %v141
    %v143 = vpop.f32.mrb[0].mxu0
    %144 = vdwg.mxu0
    %vm145 = vcmask 130048
    %v147 = vsel %vm145, %v69, 0
    %149 = vmatprep.subr.mxu0 0.0
    %150 = vmatpush1.msra.mxu0 %v65
    %151 = vmatprep.subr.mxu0 0.0
    %152 = vmatpush1.msra.mxu0 %v66
    %153 = vmatprep.subr.mxu0 0.0
    %154 = vmatpush1.msra.mxu0 0.0
    %155 = vmatprep.subr.mxu0 0.0
    %156 = vmatpush1.msra.mxu0 0.0
    %157 = vmatprep.subr.mxu0 0.0
    %158 = vmatpush1.msra.mxu0 0.0
    %159 = vmatprep.subr.mxu0 0.0
    %160 = vmatpush1.msra.mxu0 0.0
    %161 = vmatprep.subr.mxu0 0.0
    %162 = vmatpush1.msra.mxu0 0.0
    %163 = vmatprep.subr.mxu0 0.0
    %164 = vmatpush1.msra.mxu0 0.0
    %165 = vmatprep.subr.mxu0 0.0
    %166 = vmatpush1.msra.mxu0 0.0
    %167 = vmatprep.subr.mxu0 0.0
    %168 = vmatpush1.msra.mxu0 0.0
    %169 = vmatprep.subr.mxu0 0.0
    %170 = vmatpush1.msra.mxu0 0.0
    %171 = vmatprep.subr.mxu0 0.0
    %172 = vmatpush1.msra.mxu0 0.0
    %173 = vmatprep.subr.mxu0 0.0
    %174 = vmatpush1.msra.mxu0 0.0
    %175 = vmatprep.subr.mxu0 0.0
    %176 = vmatpush1.msra.mxu0 0.0
    %177 = vmatprep.subr.mxu0 0.0
    %178 = vmatpush1.msra.mxu0 0.0
    %179 = vmatprep.subr.mxu0 0.0
    %180 = vmatpush1.msra.mxu0 0.0
    %181 = vmatprep.subr.mxu0 0.0
    %182 = vmatpush1.msra.mxu0 0.0
    %183 = vmatprep.subr.mxu0 0.0
    %184 = vmatpush1.msra.mxu0 0.0
    %185 = vmatprep.subr.mxu0 0.0
    %186 = vmatpush1.msra.mxu0 0.0
    %187 = vmatprep.subr.mxu0 0.0
    %188 = vmatpush1.msra.mxu0 0.0
    %189 = vmatprep.subr.mxu0 0.0
    %190 = vmatpush1.msra.mxu0 0.0
    %191 = vmatprep.subr.mxu0 0.0
    %192 = vmatpush1.msra.mxu0 0.0
    %193 = vmatprep.subr.mxu0 0.0
    %194 = vmatpush1.msra.mxu0 0.0
    %195 = vmatprep.subr.mxu0 0.0
    %196 = vmatpush1.msra.mxu0 0.0
    %197 = vmatprep.subr.mxu0 0.0
    %198 = vmatpush1.msra.mxu0 0.0
    %199 = vmatprep.subr.mxu0 0.0
    %200 = vmatpush1.msra.mxu0 0.0
    %201 = vmatprep.subr.mxu0 0.0
    %202 = vmatpush1.msra.mxu0 0.0
    %203 = vmatprep.subr.mxu0 0.0
    %204 = vmatpush1.msra.mxu0 0.0
    %205 = vmatprep.subr.mxu0 0.0
    %206 = vmatpush1.msra.mxu0 0.0
    %207 = vmatprep.subr.mxu0 0.0
    %208 = vmatpush1.msra.mxu0 0.0
    %209 = vmatprep.subr.mxu0 0.0
    %210 = vmatpush1.msra.mxu0 0.0
    %211 = vmatprep.subr.mxu0 0.0
    %212 = vmatpush1.msra.mxu0 0.0
    %213 = vmatprep.mubr.f32.mxu0 0.0
    %214 = vmatmul.mubr.f32.gmra.mrb[0].mxu0 %v147
    %v215 = vpop.f32.mrb[0].mxu0
    %v216 = vadd.f32 %v142, %v215
    %v217 = vpop.f32.mrb[0].mxu0
    %218 = vdwg.mxu0
    %v220 = vlaneseq
    %v221 = vshrl.u32 %v220, 7
    %v222 = vsub.s32 0, %v221
    %v223 = vrot.slane %v68, %v222
    %v225 = vadd.f32 %v216, %v223
    %v226 = vmax.f32 %v225, 0.0
    %v227 = vld [vmem:[%s5] sm:$0x1]
    %v228 = vld [vmem:[#allocation2] sm:$0x1]
    %v230 = vlaneseq
    %v231 = vshrl.u32 %v230, 7
    %v232 = vsub.s32 0, %v231
    %v233 = vrot.slane %v227, %v232
    %v235 = vmul.f32 %v226, %v233
    %vm236 = vcmask 261120
    %v237 = vsel %vm236, %v235, 0.0
    %238 = vadd.xlane.f32.xlu0 %v237
    %v239 = vpop.xlane.xlu0 %238
    %v241 = vlaneseq
    %v242 = vshrl.u32 %v241, 7
    %v243 = vsub.s32 0, %v242
    %v244 = vrot.slane %v228, %v243
    %v246 = vadd.f32 %v239, %v244
    %vm247 = vcmask 7168
    %248 = vst.msk [vmem:[%s7] sm:$0xff] %vm247, %v246
    // Predicated region
    $region42: #{tpu_custom_call.1} parent=1 // pred_check
      _
    $region43: #{tpu_custom_call.1} parent=1 // pred_check_branch
      %250 = sbr.rel (0) target = $region45
    $region44: #{tpu_custom_call.1} parent=1 // pred_region
      _
    $region45: #{tpu_custom_call.1} parent=1 // pred_fallthru
      _
    // Predicated region
    $region46: #{tpu_custom_call.1} parent=1 // pred_check
      _
    $region47: #{tpu_custom_call.1} parent=1 // pred_check_branch
      %252 = sbr.rel (0) target = $region49
    $region48: #{tpu_custom_call.1} parent=1 // pred_region
      _
    $region49: #{tpu_custom_call.1} parent=1 // pred_fallthru
      _
    %253 = vsyncpa [#allocation4], 1
    %254 = vsyncpa [#allocation6], 1

</llo_original>
